<compile_context>
chip_gen: v7x
topology: tpu7x:2x2x1
jax: 0.10.0
libtpu: 0.0.40
codegen_flags: <defaults>
</compile_context>

<pallas_src>
import functools

import jax
import jax.numpy as jnp
from jax.experimental import pallas as pl
from jax.experimental.pallas import tpu as pltpu

EPS = 1e-5  # nn.LayerNorm default

MiB = 1024 * 1024


def _normed_linear_fused_kernel(x_ref, w_ref, b_ref, o_ref, *, inv_d):
    """Single-pass kernel used when the whole Dout fits in one column tile."""
    # x_ref: (TM, D); w_ref: (D, Dout); b_ref: (1, Dout); o_ref: (TM, Dout)
    x = x_ref[...].astype(jnp.float32)

    # LayerNorm statistics in f32 (biased variance, like nn.LayerNorm).
    mean = jnp.sum(x, axis=-1, keepdims=True) * inv_d
    centered = x - mean
    var = jnp.sum(centered * centered, axis=-1, keepdims=True) * inv_d
    inv_std = jax.lax.rsqrt(var + EPS)

    # MXU matmul on `centered` in the weight dtype; inv_std applied afterwards
    # to the f32 accumulator (exact algebra: xn @ W == inv_std * (centered @ W)).
    y = jnp.dot(centered.astype(w_ref.dtype), w_ref[...],
                preferred_element_type=jnp.float32)
    y = y * inv_std + b_ref[...].astype(jnp.float32)

    o_ref[...] = y.astype(o_ref.dtype)


def _normed_linear_cached_kernel(x_ref, w_ref, b_ref, o_ref,
                                 cen_ref, inv_ref, *, inv_d):
    """Column-tiled kernel: LayerNorm computed once per row tile (at j == 0),
    centered tile + inv_std cached in VMEM scratch and reused across j."""
    # x_ref: (TM, D); w_ref: (D, TN); b_ref: (1, TN); o_ref: (TM, TN)
    # cen_ref: (TM, D) scratch in matmul dtype; inv_ref: (TM, 1) f32 scratch.

    @pl.when(pl.program_id(1) == 0)
    def _():
        x = x_ref[...].astype(jnp.float32)
        mean = jnp.sum(x, axis=-1, keepdims=True) * inv_d
        centered = x - mean
        var = jnp.sum(centered * centered, axis=-1, keepdims=True) * inv_d
        inv_ref[...] = jax.lax.rsqrt(var + EPS)
        cen_ref[...] = centered.astype(cen_ref.dtype)

    y = jnp.dot(cen_ref[...], w_ref[...], preferred_element_type=jnp.float32)
    y = y * inv_ref[...] + b_ref[...].astype(jnp.float32)
    o_ref[...] = y.astype(o_ref.dtype)


def normalized_layer(x, gamma, beta, w, b, *, tm_max=512, tn_max=512):
    """Fused LayerNorm(D) -> Linear(D, Dout).

    x: [B, S, D]; gamma/beta: [D]; w: [D, Dout] (in,out layout vs torch (out,in));
    b: [Dout].
    """
    B, S, D = x.shape
    Dout = w.shape[1]
    rows = B * S

    # Fold the LayerNorm affine into the Linear parameters (exact algebra):
    #   (g * xhat + be) @ W + b  ==  xhat @ (g[:, None] * W) + (be @ W + b)
    wf = w.astype(jnp.float32)
    w_eff = (gamma.astype(jnp.float32)[:, None] * wf).astype(w.dtype)
    b_eff = (beta.astype(jnp.float32) @ wf + b.astype(jnp.float32)).reshape(1, Dout)

    xb = jnp.dtype(x.dtype).itemsize
    wb = jnp.dtype(w_eff.dtype).itemsize
    ob = xb  # output keeps x's dtype

    # ---- Generation-aware VMEM budgets -------------------------------------
    try:
        info = pltpu.get_tpu_info()
        vmem_cap = int(getattr(info, "vmem_capacity_bytes", 64 * MiB))
    except Exception:  # pragma: no cover - conservative fallback (v7x-sized)
        vmem_cap = 64 * MiB
    if vmem_cap >= 96 * MiB:            # v5e / v6e: 128 MiB physical
        vmem_cap_limit = 100 * MiB
    else:                               # v7x: 64 MiB physical, leave headroom
        vmem_cap_limit = max(32 * MiB, vmem_cap - 8 * MiB)
    vmem_budget = (vmem_cap_limit * 3) // 4   # working-set target

    # ---- Column tiling: keep the full weight resident whenever it fits -----
    weight_budget = vmem_cap // 4        # ~16 MiB on v7x, ~32 MiB on v5e/v6e
    full_dout = (2 * D * Dout * wb) <= weight_budget
    if full_dout:
        tn = Dout
        n_wbuf = 2
    else:
        tn = min(tn_max, Dout)
        tn = max(128, (tn // 128) * 128)
        n_wbuf = 3                       # pl.Buffered(3) on the weight spec

    # ---- Row tiling: biggest aligned tile whose working set fits VMEM ------
    # Counts double-buffered pipeline tiles AND in-kernel f32 temporaries
    # (x_f32, centered, matmul-dtype cast, f32 accumulator) plus the scratch
    # cache when column-tiled.
    row_align = 16  # keeps bf16 outputs on native (16,128) tiles; fine for f32

    def vmem_need(tm_):
        pipeline = (2 * tm_ * D * xb          # x row tiles
                    + n_wbuf * D * tn * wb    # weight tiles
                    + 2 * tn * 4              # bias tiles (f32)
                    + 2 * tm_ * tn * ob)      # output tiles
        temps = (2 * tm_ * D * 4              # x_f32 + centered
                 + tm_ * D * wb               # cast for the MXU
                 + tm_ * tn * 4)              # f32 accumulator
        scratch = 0 if full_dout else (tm_ * D * wb + tm_ * 4)
        return pipeline + temps + scratch

    tm = int(min(tm_max, pl.cdiv(rows, row_align) * row_align))
    tm = max(row_align, (tm // row_align) * row_align)
    while tm > row_align and vmem_need(tm) > vmem_budget:
        tm = max(row_align, ((tm // 2) // row_align) * row_align)

    grid_i = pl.cdiv(rows, tm)
    grid_j = pl.cdiv(Dout, tn)
    grid = (grid_i, grid_j)

    # No activation padding: Pallas handles the ragged last row tile; the
    # out-of-bounds rows only produce output rows whose stores are dropped
    # (LayerNorm / matmul are strictly per-row, so no contamination).
    x2 = x.reshape(rows, D)

    compiler_kwargs = dict(dimension_semantics=("parallel", "arbitrary"))
    need = vmem_need(tm)
    if need > 16 * MiB:  # v5e's scoped default is 16 MiB, v6e/v7x 32 MiB
        compiler_kwargs["vmem_limit_bytes"] = int(
            min(max(need * 5 // 4, 32 * MiB), vmem_cap_limit))

    weight_bytes = (1 if full_dout else grid_i) * D * Dout * wb
    cost = pl.CostEstimate(
        flops=2 * rows * D * Dout,
        transcendentals=rows,  # one rsqrt per row (cached across column tiles)
        bytes_accessed=(rows * D * xb       # x read once per row tile
                        + weight_bytes      # weight re-stream only when tiled
                        + Dout * 4
                        + rows * Dout * ob),
    )

    if full_dout:
        kernel = functools.partial(_normed_linear_fused_kernel, inv_d=1.0 / D)
        scratch_shapes = ()
        w_spec = pl.BlockSpec((D, tn), lambda i, j: (0, j))
    else:
        kernel = functools.partial(_normed_linear_cached_kernel, inv_d=1.0 / D)
        scratch_shapes = [
            pltpu.VMEM((tm, D), w_eff.dtype),   # cached centered tile
            pltpu.VMEM((tm, 1), jnp.float32),   # cached per-row inv_std
        ]
        # Deeper buffering hides the per-step D x tn weight re-fetch.
        w_spec = pl.BlockSpec((D, tn), lambda i, j: (0, j),
                              pipeline_mode=pl.Buffered(3))

    out2 = pl.pallas_call(
        kernel,
        out_shape=jax.ShapeDtypeStruct((rows, Dout), x.dtype),
        grid_spec=pltpu.PrefetchScalarGridSpec(
            num_scalar_prefetch=0,
            grid=grid,
            in_specs=[
                pl.BlockSpec((tm, D), lambda i, j: (i, 0)),   # x row tile
                w_spec,                                        # folded weight
                pl.BlockSpec((1, tn), lambda i, j: (0, j)),   # folded bias
            ],
            out_specs=pl.BlockSpec((tm, tn), lambda i, j: (i, j)),
            scratch_shapes=scratch_shapes,
        ),
        compiler_params=pltpu.CompilerParams(**compiler_kwargs),
        cost_estimate=cost,
    )(x2, w_eff, b_eff)

    return out2.reshape(B, S, Dout)


def _reference(x, gamma, beta, w, b):
    xf = x.astype(jnp.float32)
    mean = jnp.mean(xf, axis=-1, keepdims=True)
    var = jnp.mean((xf - mean) ** 2, axis=-1, keepdims=True)
    xn = (xf - mean) * jax.lax.rsqrt(var + EPS)
    xn = xn * gamma.astype(jnp.float32) + beta.astype(jnp.float32)
    return (xn @ w.astype(jnp.float32) + b.astype(jnp.float32)).astype(x.dtype)


if __name__ == "__main__":
    B, S, D = 2, 8, 32   # small ViT-ish shapes: batch=2, seq=8, hidden=32
    Dout = D

    key = jax.random.PRNGKey(0)
    kx, kw, kb, kg, kbe = jax.random.split(key, 5)

    x = jax.random.normal(kx, (B, S, D), dtype=jnp.float32)

    # Non-trivial LayerNorm affine to exercise the gamma/beta folding path.
    gamma = 1.0 + 0.1 * jax.random.normal(kg, (D,), dtype=jnp.float32)
    beta = 0.05 * jax.random.normal(kbe, (D,), dtype=jnp.float32)
    # Torch Linear stores weight as (out, in); we pass it pre-transposed (in, out).
    w = jax.random.normal(kw, (D, Dout), dtype=jnp.float32) * 0.02
    b = jax.random.normal(kb, (Dout,), dtype=jnp.float32) * 0.02

    y = normalized_layer(x, gamma, beta, w, b)
    y = jax.block_until_ready(y)

    y_ref = _reference(x, gamma, beta, w, b)
    assert y.shape == (B, S, Dout)
    assert jnp.allclose(y, y_ref, atol=1e-4, rtol=1e-4), "mismatch vs reference"

    print("KERNEL_OK")
</pallas_src>

<mosaic_0001>
module attributes {stable_mosaic.version = 11 : i64} {
  func.func @_normed_linear_fused_kernel(%arg0: i32, %arg1: i32, %arg2: memref<16x32xf32, #tpu.memory_space<vmem>>, %arg3: memref<32x32xf32, #tpu.memory_space<vmem>>, %arg4: memref<1x32xf32, #tpu.memory_space<vmem>>, %arg5: memref<16x32xf32, #tpu.memory_space<vmem>>) attributes {dimension_semantics = [#tpu.dimension_semantics<parallel>, #tpu.dimension_semantics<arbitrary>], iteration_bounds = array<i64: 1, 1>, scalar_prefetch = 0 : i64, scratch_operands = 0 : i64, tpu.core_type = #tpu.core_type<tc>, window_params = [{transform_indices = @transform_0, window_bounds = array<i64: 16, 32>}, {transform_indices = @transform_1, window_bounds = array<i64: 32, 32>}, {transform_indices = @transform_2, window_bounds = array<i64: 1, 32>}, {transform_indices = @transform_3, window_bounds = array<i64: 16, 32>}]} {
    %c0 = arith.constant 0 : index
    %c0_0 = arith.constant 0 : index
    %0 = vector.load %arg2[%c0, %c0_0] : memref<16x32xf32, #tpu.memory_space<vmem>>, vector<16x32xf32>
    %cst = arith.constant dense<0.000000e+00> : vector<16xf32>
    %1 = vector.multi_reduction <add>, %0, %cst [1] : vector<16x32xf32> to vector<16xf32>
    %2 = vector.shape_cast %1 : vector<16xf32> to vector<16x1xf32>
    %cst_1 = arith.constant 3.125000e-02 : f32
    %3 = vector.broadcast %cst_1 : f32 to vector<16x1xf32>
    %4 = arith.mulf %2, %3 : vector<16x1xf32>
    %5 = vector.broadcast %4 : vector<16x1xf32> to vector<16x32xf32>
    %6 = arith.subf %0, %5 : vector<16x32xf32>
    %7 = arith.mulf %6, %6 : vector<16x32xf32>
    %cst_2 = arith.constant dense<0.000000e+00> : vector<16xf32>
    %8 = vector.multi_reduction <add>, %7, %cst_2 [1] : vector<16x32xf32> to vector<16xf32>
    %9 = vector.shape_cast %8 : vector<16xf32> to vector<16x1xf32>
    %cst_3 = arith.constant 3.125000e-02 : f32
    %10 = vector.broadcast %cst_3 : f32 to vector<16x1xf32>
    %11 = arith.mulf %9, %10 : vector<16x1xf32>
    %cst_4 = arith.constant 9.99999974E-6 : f32
    %12 = vector.broadcast %cst_4 : f32 to vector<16x1xf32>
    %13 = arith.addf %11, %12 : vector<16x1xf32>
    %14 = math.rsqrt %13 : vector<16x1xf32>
    %c0_5 = arith.constant 0 : index
    %c0_6 = arith.constant 0 : index
    %15 = vector.load %arg3[%c0_5, %c0_6] : memref<32x32xf32, #tpu.memory_space<vmem>>, vector<32x32xf32>
    %cst_7 = arith.constant dense<0.000000e+00> : vector<16x32xf32>
    %16 = tpu.matmul %6, %15, %cst_7 {dimension_numbers = #tpu.dot_dimension_numbers<[1], [0], [0], [1], [0, 0, 1, 1], [], []>} : vector<16x32xf32>, vector<32x32xf32>, vector<16x32xf32> -> vector<16x32xf32>
    %17 = vector.broadcast %14 : vector<16x1xf32> to vector<16x32xf32>
    %18 = arith.mulf %16, %17 : vector<16x32xf32>
    %c0_8 = arith.constant 0 : index
    %c0_9 = arith.constant 0 : index
    %19 = vector.load %arg4[%c0_8, %c0_9] : memref<1x32xf32, #tpu.memory_space<vmem>>, vector<1x32xf32>
    %20 = vector.broadcast %19 : vector<1x32xf32> to vector<16x32xf32>
    %21 = arith.addf %18, %20 : vector<16x32xf32>
    %c0_10 = arith.constant 0 : index
    %c0_11 = arith.constant 0 : index
    %22 = vector.load %arg5[%c0_10, %c0_11] : memref<16x32xf32, #tpu.memory_space<vmem>>, vector<16x32xf32>
    tpu.vector_store %arg5[%c0_10, %c0_11], %21 {strides = array<i32>} : memref<16x32xf32, #tpu.memory_space<vmem>>, vector<16x32xf32>,
    return
  }
  func.func @transform_0(%arg0: i32, %arg1: i32) -> (i32, i32) {
    %c0_i32 = arith.constant 0 : i32
    %c0_i32_0 = arith.constant 0 : i32
    return %arg0, %c0_i32 : i32, i32
  }
  func.func @transform_1(%arg0: i32, %arg1: i32) -> (i32, i32) {
    %c0_i32 = arith.constant 0 : i32
    %c0_i32_0 = arith.constant 0 : i32
    return %c0_i32, %arg1 : i32, i32
  }
  func.func @transform_2(%arg0: i32, %arg1: i32) -> (i32, i32) {
    %c0_i32 = arith.constant 0 : i32
    %c0_i32_0 = arith.constant 0 : i32
    return %c0_i32, %arg1 : i32, i32
  }
  func.func @transform_3(%arg0: i32, %arg1: i32) -> (i32, i32) {
    %c0_i32 = arith.constant 0 : i32
    return %arg0, %arg1 : i32, i32
  }
}

</mosaic_0001>

<llo_original>
// kernel: tpu_custom_call.1
$region0: #{tpu_custom_call.1}
  #allocation0 [shape = 'u32[]', space=smem, size = 0x4, offset = 0x4, fixed_abs, tag = 'smem constant byte address 0x4 - core index']
  #allocation1 [shape = 'u32[144,128]{1,0:T(1,128)}', space=vmem, size = 0x12000, scoped, tag = 'internal scratch']
  %s0 = inlined_call_operand.hbm [shape: f32[16,32], index: 0, kind: input, shape index: {}]
  %s1 = inlined_call_operand.hbm [shape: f32[32,32], index: 1, kind: input, shape index: {}]
  %s2 = inlined_call_operand.vmem [shape: f32[1,32], index: 2, kind: input, shape index: {}]
  %s3 = inlined_call_operand.hbm [shape: f32[16,32], index: 3, kind: output, shape index: {}]
  %s4 = sld [smem:[#allocation0]]
  $region30: #{tpu_custom_call.1} parent=0
    _
  %s6 = ssub.s32 1, %s4
  %s7 = scalar_select 0, %s6, %s4
  $region1: #{tpu_custom_call.1} parent=0
    #allocation2 [shape = 'u8[8192]{0}', space=vmem, size = 0x2000, scoped, tag = 'input window, operand 0, single buffered']
    #allocation3 [shape = 's32[1]{0}', space=sflag, size = 0x4, scoped, tag = 'scoped memory for tpu_custom_call.1']
    #allocation4 [shape = 's32[1]{0}', space=sflag, size = 0x4, scoped, tag = 'scoped memory for tpu_custom_call.1']
    #allocation5 [shape = 'u8[16384]{0}', space=vmem, size = 0x4000, scoped, tag = 'input window, operand 1, single buffered']
    #allocation6 [shape = 's32[1]{0}', space=sflag, size = 0x4, scoped, tag = 'scoped memory for tpu_custom_call.1']
    #allocation7 [shape = 'u8[8192]{0}', space=vmem, size = 0x2000, scoped, tag = 'output window, operand 0, single buffered']
    %8 = vsyncpa [#allocation3], 0
    %9 = vsyncpa [#allocation6], 0
    %10 = vsyncpa [#allocation4], 0
    // Predicated region
    $region2: #{tpu_custom_call.1} parent=1 // pred_check
      _
    $region3: #{tpu_custom_call.1} parent=1 // pred_check_branch
      %12 = sbr.rel (0) target = $region5
    $region4: #{tpu_custom_call.1} parent=1 // pred_region
      %s14 = ssub.s32 256, 256
      %15 = vsyncadd [#allocation3], %s14
      %s16 = sshll.u32 [#allocation2], 4
      %s17 = int_to_ptr.vmem [resolvable:$true] %s16
      %22 = dma.hbm_to_vmem [thread:$0]  %s0, 256, %s17, [#allocation3], 128, 128, 8
    $region5: #{tpu_custom_call.1} parent=1 // pred_fallthru
      _
    // Predicated region
    $region6: #{tpu_custom_call.1} parent=1 // pred_check
      _
    $region7: #{tpu_custom_call.1} parent=1 // pred_check_branch
      %24 = sbr.rel (0) target = $region9
    $region8: #{tpu_custom_call.1} parent=1 // pred_region
      %s26 = ssub.s32 512, 512
      %27 = vsyncadd [#allocation6], %s26
      %s28 = sshll.u32 [#allocation5], 4
      %s29 = int_to_ptr.vmem [resolvable:$true] %s28
      %34 = dma.hbm_to_vmem [thread:$0]  %s1, 512, %s29, [#allocation6], 128, 128, 8
    $region9: #{tpu_custom_call.1} parent=1 // pred_fallthru
      _
    // Predicated region
    $region10: #{tpu_custom_call.1} parent=1 // pred_check
      _
    $region11: #{tpu_custom_call.1} parent=1 // pred_check_branch
      %36 = sbr.rel (0) target = $region13
    $region12: #{tpu_custom_call.1} parent=1 // pred_region
      _
    $region13: #{tpu_custom_call.1} parent=1 // pred_fallthru
      _
    // Predicated region
    $region14: #{tpu_custom_call.1} parent=1 // pred_check
      _
    $region15: #{tpu_custom_call.1} parent=1 // pred_check_branch
      %38 = sbr.rel (0) target = $region17
    $region16: #{tpu_custom_call.1} parent=1 // pred_region
      %39 = dma.done [#allocation3], 256
    $region17: #{tpu_custom_call.1} parent=1 // pred_fallthru
      _
    // Predicated region
    $region18: #{tpu_custom_call.1} parent=1 // pred_check
      _
    $region19: #{tpu_custom_call.1} parent=1 // pred_check_branch
      %41 = sbr.rel (0) target = $region21
    $region20: #{tpu_custom_call.1} parent=1 // pred_region
      %42 = dma.done [#allocation6], 512
    $region21: #{tpu_custom_call.1} parent=1 // pred_fallthru
      _
    %v43 = vld [vmem:[#allocation2] sm:$0xff]
    %v44 = vld [vmem:[#allocation2 + $0x8] sm:$0xff]
    %vm45 = vcmask 261120
    %v46 = vsel %vm45, %v43, 0.0
    %47 = vadd.xlane.f32.xlu0 %v46
    %v48 = vpop.xlane.xlu0 %47
    %v49 = vsel %vm45, %v44, 0.0
    %50 = vadd.xlane.f32.xlu0 %v49
    %v51 = vpop.xlane.xlu0 %50
    %v52 = vmul.f32 %v48, 0.03125
    %v53 = vmul.f32 %v51, 0.03125
    %v54 = vsub.f32 %v43, %v52
    %v55 = vsub.f32 %v44, %v53
    %v56 = vmul.f32 %v54, %v54
    %v57 = vmul.f32 %v55, %v55
    %v58 = vsel %vm45, %v56, 0.0
    %59 = vadd.xlane.f32.xlu0 %v58
    %v60 = vpop.xlane.xlu0 %59
    %v61 = vsel %vm45, %v57, 0.0
    %62 = vadd.xlane.f32.xlu0 %v61
    %v63 = vpop.xlane.xlu0 %62
    %v64 = vmul.f32 %v60, 0.03125
    %v65 = vmul.f32 %v63, 0.03125
    %v66 = vadd.f32 %v64, 1e-05
    %v67 = vadd.f32 %v65, 1e-05
    %v68 = vrsqrt.pop %v66
    %v69 = vrsqrt.pop %v67
    %v70 = vld [vmem:[#allocation5] sm:$0xff]
    %v71 = vld [vmem:[#allocation5 + $0x8] sm:$0xff]
    %v72 = vld [vmem:[#allocation5 + $0x10] sm:$0xff]
    %v73 = vld [vmem:[#allocation5 + $0x18] sm:$0xff]
    %v75 = vsel %vm45, %v54, 0
    %v78 = vsel %vm45, %v55, 0
    %80 = vmatprep.subr.mxu0 0.0
    %81 = vmatpush1.msra.mxu0 %v70
    %82 = vmatprep.subr.mxu0 0.0
    %83 = vmatpush1.msra.mxu0 %v71
    %84 = vmatprep.subr.mxu0 0.0
    %85 = vmatpush1.msra.mxu0 %v72
    %86 = vmatprep.subr.mxu0 0.0
    %87 = vmatpush1.msra.mxu0 %v73
    %88 = vmatprep.subr.mxu0 0.0
    %89 = vmatpush1.msra.mxu0 0.0
    %90 = vmatprep.subr.mxu0 0.0
    %91 = vmatpush1.msra.mxu0 0.0
    %92 = vmatprep.subr.mxu0 0.0
    %93 = vmatpush1.msra.mxu0 0.0
    %94 = vmatprep.subr.mxu0 0.0
    %95 = vmatpush1.msra.mxu0 0.0
    %96 = vmatprep.subr.mxu0 0.0
    %97 = vmatpush1.msra.mxu0 0.0
    %98 = vmatprep.subr.mxu0 0.0
    %99 = vmatpush1.msra.mxu0 0.0
    %100 = vmatprep.subr.mxu0 0.0
    %101 = vmatpush1.msra.mxu0 0.0
    %102 = vmatprep.subr.mxu0 0.0
    %103 = vmatpush1.msra.mxu0 0.0
    %104 = vmatprep.subr.mxu0 0.0
    %105 = vmatpush1.msra.mxu0 0.0
    %106 = vmatprep.subr.mxu0 0.0
    %107 = vmatpush1.msra.mxu0 0.0
    %108 = vmatprep.subr.mxu0 0.0
    %109 = vmatpush1.msra.mxu0 0.0
    %110 = vmatprep.subr.mxu0 0.0
    %111 = vmatpush1.msra.mxu0 0.0
    %112 = vmatprep.subr.mxu0 0.0
    %113 = vmatpush1.msra.mxu0 0.0
    %114 = vmatprep.subr.mxu0 0.0
    %115 = vmatpush1.msra.mxu0 0.0
    %116 = vmatprep.subr.mxu0 0.0
    %117 = vmatpush1.msra.mxu0 0.0
    %118 = vmatprep.subr.mxu0 0.0
    %119 = vmatpush1.msra.mxu0 0.0
    %120 = vmatprep.subr.mxu0 0.0
    %121 = vmatpush1.msra.mxu0 0.0
    %122 = vmatprep.subr.mxu0 0.0
    %123 = vmatpush1.msra.mxu0 0.0
    %124 = vmatprep.subr.mxu0 0.0
    %125 = vmatpush1.msra.mxu0 0.0
    %126 = vmatprep.subr.mxu0 0.0
    %127 = vmatpush1.msra.mxu0 0.0
    %128 = vmatprep.subr.mxu0 0.0
    %129 = vmatpush1.msra.mxu0 0.0
    %130 = vmatprep.subr.mxu0 0.0
    %131 = vmatpush1.msra.mxu0 0.0
    %132 = vmatprep.subr.mxu0 0.0
    %133 = vmatpush1.msra.mxu0 0.0
    %134 = vmatprep.subr.mxu0 0.0
    %135 = vmatpush1.msra.mxu0 0.0
    %136 = vmatprep.subr.mxu0 0.0
    %137 = vmatpush1.msra.mxu0 0.0
    %138 = vmatprep.subr.mxu0 0.0
    %139 = vmatpush1.msra.mxu0 0.0
    %140 = vmatprep.subr.mxu0 0.0
    %141 = vmatpush1.msra.mxu0 0.0
    %142 = vmatprep.subr.mxu0 0.0
    %143 = vmatpush1.msra.mxu0 0.0
    %144 = vmatprep.mubr.f32.mxu0 0.0
    %145 = vmatmul.mubr.f32.gmra.mrb[0].mxu0 %v75
    %v146 = vpop.f32.mrb[0].mxu0
    %v147 = vadd.f32 0.0, %v146
    %v148 = vpop.f32.mrb[0].mxu0
    %149 = vmatprep.mubr.f32.mxu0 0.0
    %150 = vmatmul.mubr.f32.gmra.mrb[0].mxu0 %v78
    %v151 = vpop.f32.mrb[0].mxu0
    %v152 = vadd.f32 0.0, %v151
    %v153 = vpop.f32.mrb[0].mxu0
    %154 = vdwg.mxu0
    %v155 = vmul.f32 %v147, %v68
    %v156 = vmul.f32 %v152, %v69
    %v157 = vld [vmem:[%s2] sm:$0x1]
    %v159 = vlaneseq
    %v160 = vshrl.u32 %v159, 7
    %v161 = vsub.s32 0, %v160
    %v162 = vrot.slane %v157, %v161
    %v164 = vadd.f32 %v155, %v162
    %v165 = vadd.f32 %v156, %v162
    %166 = vst.msk [vmem:[#allocation7] sm:$0xff] %vm45, %v164
    %167 = vst.msk [vmem:[#allocation7 + $0x8] sm:$0xff] %vm45, %v165
    // Predicated region
    $region22: #{tpu_custom_call.1} parent=1 // pred_check
      _
    $region23: #{tpu_custom_call.1} parent=1 // pred_check_branch
      %169 = sbr.rel (0) target = $region25
    $region24: #{tpu_custom_call.1} parent=1 // pred_region
      %s171 = ssub.s32 256, 256
      %172 = vsyncadd [#allocation4], %s171
      %s173 = sshll.u32 [#allocation7], 4
      %s174 = int_to_ptr.vmem [resolvable:$true] %s173
      %179 = dma.vmem_to_hbm [thread:$0]  %s174, 256, %s3, [#allocation4], 128, 128, 8
    $region25: #{tpu_custom_call.1} parent=1 // pred_fallthru
      _
    // Predicated region
    $region26: #{tpu_custom_call.1} parent=1 // pred_check
      _
    $region27: #{tpu_custom_call.1} parent=1 // pred_check_branch
      %181 = sbr.rel (0) target = $region29
    $region28: #{tpu_custom_call.1} parent=1 // pred_region
      %182 = dma.done [#allocation4], 256
    $region29: #{tpu_custom_call.1} parent=1 // pred_fallthru
      _
    %183 = vsyncpa [#allocation3], 1
    %184 = vsyncpa [#allocation6], 1
    %185 = vsyncpa [#allocation4], 1

</llo_original>
